<compile_context>
chip_gen: v5e
topology: v5e:2x2
jax: 0.10.0
libtpu: 0.0.40
codegen_flags: <defaults>
</compile_context>

<pallas_src>
import jax
import jax.numpy as jnp
from jax.experimental import pallas as pl
from jax.experimental.pallas import tpu as pltpu


# ---------------------------------------------------------------------------
# Helpers
# ---------------------------------------------------------------------------

def _round_up(x, m):
    return (x + m - 1) // m * m


def _choose_tiles(N, M, tm_max=256, tn_max=256):
    # tm: sublane-aligned (multiple of 8); tn: lane-aligned (multiple of 128).
    tm = min(tm_max, _round_up(N, 8))
    tn = min(tn_max, _round_up(M, 128))
    return tm, tn


def _pad_rows(A, rows):
    n = A.shape[0]
    if rows == n:
        return A
    return jnp.pad(A, ((0, rows - n), (0, 0)))


# ---------------------------------------------------------------------------
# Pallas kernel bodies
# ---------------------------------------------------------------------------

def _linear_body(x_ref, yt_ref, o_ref):
    # x_ref: (tm, D) tile of X;  yt_ref: (D, tn) tile of Y^T (pre-transposed
    # once in the wrapper).  Native-dtype operands -> MXU, f32 accumulation.
    o_ref[...] = jnp.dot(
        x_ref[...], yt_ref[...],
        preferred_element_type=jnp.float32).astype(o_ref.dtype)


def _rbf_body(gamma_ref, x_ref, yt_ref, ysq_ref, o_ref):
    # ||x - y||^2 = ||x||^2 + ||y||^2 - 2 x.y, d2/exp arithmetic kept in f32.
    gamma = gamma_ref[0]                                        # SMEM scalar
    dot = jnp.dot(x_ref[...], yt_ref[...],
                  preferred_element_type=jnp.float32)           # (tm, tn)
    xf = x_ref[...].astype(jnp.float32)
    xsq = jnp.sum(xf * xf, axis=-1, keepdims=True)              # (tm, 1)
    d2 = jnp.maximum(xsq + ysq_ref[...] - 2.0 * dot, 0.0)       # (tm, tn)
    o_ref[...] = jnp.exp(-gamma * d2).astype(o_ref.dtype)


# ---------------------------------------------------------------------------
# Wrappers (pallas_call plumbing)
# ---------------------------------------------------------------------------

def linear_kernel(X, Y=None, *, tm_max=256, tn_max=256, out_dtype=None):
    """K[i, j] = <X[i], Y[j]>  (Gram matrix when Y is None)."""
    if Y is None:
        Y = X
    N, D = X.shape
    M, Dy = Y.shape
    assert D == Dy, "feature dims must match"
    if out_dtype is None:
        out_dtype = jnp.promote_types(X.dtype, Y.dtype)

    tm, tn = _choose_tiles(N, M, tm_max, tn_max)
    Np, Mp = _round_up(N, tm), _round_up(M, tn)
    Xp = _pad_rows(X, Np)
    Yt = _pad_rows(Y, Mp).T                                     # (D, Mp)

    grid = (Np // tm, Mp // tn)
    # TODO(synk): for very large D, add a third (K) grid axis with a VMEM
    # accumulator instead of keeping the full D extent resident per step.
    out = pl.pallas_call(
        _linear_body,
        out_shape=jax.ShapeDtypeStruct((Np, Mp), out_dtype),
        grid_spec=pltpu.PrefetchScalarGridSpec(
            num_scalar_prefetch=0,
            grid=grid,
            in_specs=[
                pl.BlockSpec((tm, D), lambda i, j: (i, 0)),     # X row tile
                pl.BlockSpec((D, tn), lambda i, j: (0, j)),     # Y^T col tile
            ],
            out_specs=pl.BlockSpec((tm, tn), lambda i, j: (i, j)),
        ),
        compiler_params=pltpu.CompilerParams(
            dimension_semantics=("parallel", "parallel")),
        cost_estimate=pl.CostEstimate(
            flops=2 * N * M * D,
            transcendentals=0,
            bytes_accessed=(N * D + M * D) * X.dtype.itemsize
                           + N * M * jnp.dtype(out_dtype).itemsize),
    )(Xp, Yt)
    return out[:N, :M]


def rbf_kernel(X, Y=None, gamma=1.0, *, tm_max=256, tn_max=256,
               out_dtype=None):
    """K[i, j] = exp(-gamma * ||X[i] - Y[j]||^2)."""
    if Y is None:
        Y = X
    N, D = X.shape
    M, Dy = Y.shape
    assert D == Dy, "feature dims must match"
    if out_dtype is None:
        out_dtype = jnp.promote_types(X.dtype, Y.dtype)

    tm, tn = _choose_tiles(N, M, tm_max, tn_max)
    Np, Mp = _round_up(N, tm), _round_up(M, tn)
    Xp = _pad_rows(X, Np)
    Yp = _pad_rows(Y, Mp)
    Yt = Yp.T                                                   # (D, Mp)
    # ||y_j||^2 hoisted out of the grid loop (Y is constant across row tiles).
    ysq = jnp.sum(Yp.astype(jnp.float32) ** 2, axis=-1)[None, :]  # (1, Mp) f32
    gamma_arr = jnp.full((1,), gamma, dtype=jnp.float32)        # SMEM scalar

    grid = (Np // tm, Mp // tn)
    out = pl.pallas_call(
        _rbf_body,
        out_shape=jax.ShapeDtypeStruct((Np, Mp), out_dtype),
        grid_spec=pltpu.PrefetchScalarGridSpec(
            num_scalar_prefetch=0,
            grid=grid,
            in_specs=[
                pl.BlockSpec(memory_space=pltpu.MemorySpace.SMEM),  # gamma
                pl.BlockSpec((tm, D), lambda i, j: (i, 0)),         # X row tile
                pl.BlockSpec((D, tn), lambda i, j: (0, j)),         # Y^T col tile
                pl.BlockSpec((1, tn), lambda i, j: (0, j)),         # ||y||^2 tile
            ],
            out_specs=pl.BlockSpec((tm, tn), lambda i, j: (i, j)),
        ),
        compiler_params=pltpu.CompilerParams(
            dimension_semantics=("parallel", "parallel")),
        cost_estimate=pl.CostEstimate(
            flops=2 * N * M * D + 6 * N * M,
            transcendentals=N * M,
            bytes_accessed=(N * D + M * D) * X.dtype.itemsize
                           + N * M * jnp.dtype(out_dtype).itemsize),
    )(gamma_arr, Xp, Yt, ysq)
    return out[:N, :M]


def identity(X):
    # Faithful to the reference implementation: takes a single argument.
    return X


# ---------------------------------------------------------------------------
# The `Kernels` module (JAX port of torchsl/nn/kernel.py)
# ---------------------------------------------------------------------------

class Kernels:
    def __init__(self, metrics, params_kwargs=None, landmarks=None):
        if not hasattr(metrics, '__len__'):
            metrics = list(metrics)
        self.metrics = [m if m is not None else identity for m in metrics]
        if params_kwargs is not None:
            self.params_kwargs = [d if d is not None else dict()
                                  for d in params_kwargs]
        else:
            self.params_kwargs = [dict() for _ in range(len(self.metrics))]
        self.landmarks = (landmarks if landmarks is not None
                          else [None for _ in range(len(self.metrics))])
        if not all(callable(m) for m in self.metrics):
            raise AttributeError('All metrics must be callable.')
        if not all(isinstance(k, dict) for k in self.params_kwargs):
            raise AttributeError(
                f'Metric parameters must be of type dictionary, got '
                f'{(type(k) for k in self.params_kwargs)}.')

    def forward(self, Xs):
        return [metric(X, Y, **kwargs)
                for X, Y, metric, kwargs in zip(
                    Xs, self.landmarks, self.metrics, self.params_kwargs)]

    __call__ = forward


# ---------------------------------------------------------------------------
# Demo / smoke test
# ---------------------------------------------------------------------------

if __name__ == "__main__":
    key = jax.random.PRNGKey(0)
    k1, k2, k3 = jax.random.split(key, 3)

    # Two "views": view 1 -> linear kernel w.r.t. itself (landmark=None),
    #              view 2 -> rbf kernel w.r.t. 8 fixed landmarks.
    # N deliberately not a multiple of the row tile to exercise padding.
    N, D = 30, 32
    M_land = 8
    X1 = jax.random.normal(k1, (N, D), dtype=jnp.float32)
    X2 = jax.random.normal(k2, (N, D), dtype=jnp.float32)
    landmarks2 = jax.random.normal(k3, (M_land, D), dtype=jnp.float32)

    model = Kernels(
        metrics=[linear_kernel, rbf_kernel],
        params_kwargs=[None, {'gamma': 0.5}],
        landmarks=[None, landmarks2],
    )

    outs = model([X1, X2])
    outs = [jax.block_until_ready(o) for o in outs]

    # Reference check in plain JAX.
    ref_lin = X1 @ X1.T
    d2 = (jnp.sum(X2 ** 2, -1, keepdims=True)
          + jnp.sum(landmarks2 ** 2, -1)[None, :]
          - 2.0 * X2 @ landmarks2.T)
    ref_rbf = jnp.exp(-0.5 * jnp.maximum(d2, 0.0))

    assert outs[0].shape == (N, N) and outs[1].shape == (N, M_land)
    assert jnp.allclose(outs[0], ref_lin, atol=1e-4, rtol=1e-4)
    assert jnp.allclose(outs[1], ref_rbf, atol=1e-4, rtol=1e-4)

    print("KERNEL_OK")
</pallas_src>

<mosaic_0001>
module attributes {stable_mosaic.version = 11 : i64} {
  func.func @_linear_body(%arg0: i32, %arg1: i32, %arg2: memref<32x32xf32, #tpu.memory_space<vmem>>, %arg3: memref<32x128xf32, #tpu.memory_space<vmem>>, %arg4: memref<32x128xf32, #tpu.memory_space<vmem>>) attributes {dimension_semantics = [#tpu.dimension_semantics<parallel>, #tpu.dimension_semantics<parallel>], iteration_bounds = array<i64: 1, 1>, scalar_prefetch = 0 : i64, scratch_operands = 0 : i64, tpu.core_type = #tpu.core_type<tc>, window_params = [{transform_indices = @transform_0, window_bounds = array<i64: 32, 32>}, {transform_indices = @transform_1, window_bounds = array<i64: 32, 128>}, {transform_indices = @transform_2, window_bounds = array<i64: 32, 128>}]} {
    %c0 = arith.constant 0 : index
    %c0_0 = arith.constant 0 : index
    %0 = vector.load %arg2[%c0, %c0_0] : memref<32x32xf32, #tpu.memory_space<vmem>>, vector<32x32xf32>
    %c0_1 = arith.constant 0 : index
    %c0_2 = arith.constant 0 : index
    %1 = vector.load %arg3[%c0_1, %c0_2] : memref<32x128xf32, #tpu.memory_space<vmem>>, vector<32x128xf32>
    %cst = arith.constant dense<0.000000e+00> : vector<32x128xf32>
    %2 = tpu.matmul %0, %1, %cst {dimension_numbers = #tpu.dot_dimension_numbers<[1], [0], [0], [1], [0, 0, 1, 1], [], []>} : vector<32x32xf32>, vector<32x128xf32>, vector<32x128xf32> -> vector<32x128xf32>
    %c0_3 = arith.constant 0 : index
    %c0_4 = arith.constant 0 : index
    %3 = vector.load %arg4[%c0_3, %c0_4] : memref<32x128xf32, #tpu.memory_space<vmem>>, vector<32x128xf32>
    tpu.vector_store %arg4[%c0_3, %c0_4], %2 {strides = array<i32>} : memref<32x128xf32, #tpu.memory_space<vmem>>, vector<32x128xf32>,
    return
  }
  func.func @transform_0(%arg0: i32, %arg1: i32) -> (i32, i32) {
    %c0_i32 = arith.constant 0 : i32
    %c0_i32_0 = arith.constant 0 : i32
    return %arg0, %c0_i32 : i32, i32
  }
  func.func @transform_1(%arg0: i32, %arg1: i32) -> (i32, i32) {
    %c0_i32 = arith.constant 0 : i32
    %c0_i32_0 = arith.constant 0 : i32
    return %c0_i32, %arg1 : i32, i32
  }
  func.func @transform_2(%arg0: i32, %arg1: i32) -> (i32, i32) {
    %c0_i32 = arith.constant 0 : i32
    return %arg0, %arg1 : i32, i32
  }
}

</mosaic_0001>

<llo_original>
// kernel: tpu_custom_call.1
$region0: #{tpu_custom_call.1}
  #allocation0 [shape = 'u32[]', space=smem, size = 0x4, offset = 0x4, fixed_abs, tag = 'smem constant byte address 0x4 - core index']
  #allocation1 [shape = 'u32[72,128]{1,0:T(1,128)}', space=vmem, size = 0x9000, scoped, tag = 'internal scratch']
  %s0 = inlined_call_operand.hbm [shape: f32[32,32], index: 0, kind: input, shape index: {}]
  %s1 = inlined_call_operand.hbm [shape: f32[32,128], index: 1, kind: input, shape index: {}]
  %s2 = inlined_call_operand.hbm [shape: f32[32,128], index: 2, kind: output, shape index: {}]
  %s3 = sld [smem:[#allocation0]]
  $region26: #{tpu_custom_call.1} parent=0
    _
  %s5 = ssub.s32 1, %s3
  %s6 = scalar_select 0, %s5, %s3
  $region1: #{tpu_custom_call.1} parent=0
    #allocation2 [shape = 'u8[16384]{0}', space=vmem, size = 0x4000, scoped, tag = 'input window, operand 0, single buffered']
    #allocation3 [shape = 's32[1]{0}', space=sflag, size = 0x4, scoped, tag = 'scoped memory for tpu_custom_call.1']
    #allocation4 [shape = 's32[1]{0}', space=sflag, size = 0x4, scoped, tag = 'scoped memory for tpu_custom_call.1']
    #allocation5 [shape = 'u8[16384]{0}', space=vmem, size = 0x4000, scoped, tag = 'input window, operand 1, single buffered']
    #allocation6 [shape = 's32[1]{0}', space=sflag, size = 0x4, scoped, tag = 'scoped memory for tpu_custom_call.1']
    #allocation7 [shape = 'u8[16384]{0}', space=vmem, size = 0x4000, scoped, tag = 'output window, operand 0, single buffered']
    %7 = vsyncpa [#allocation3], 0
    %8 = vsyncpa [#allocation6], 0
    %9 = vsyncpa [#allocation4], 0
    // Predicated region
    $region2: #{tpu_custom_call.1} parent=1 // pred_check
      _
    $region3: #{tpu_custom_call.1} parent=1 // pred_check_branch
      %11 = sbr.rel (0) target = $region5
    $region4: #{tpu_custom_call.1} parent=1 // pred_region
      %13 = vsyncadd [#allocation3], 0
      %s14 = sshll.u32 %s0, 4
      %s15 = int_to_ptr.hbm [resolvable:$true] %s14
      %s16 = sshll.u32 [#allocation2], 4
      %s17 = int_to_ptr.vmem [resolvable:$true] %s16
      %22 = dma.hbm_to_vmem [thread:$0]  %s15, 512, %s17, [#allocation3], 128, 128, 8
    $region5: #{tpu_custom_call.1} parent=1 // pred_fallthru
      _
    // Predicated region
    $region6: #{tpu_custom_call.1} parent=1 // pred_check
      _
    $region7: #{tpu_custom_call.1} parent=1 // pred_check_branch
      %24 = sbr.rel (0) target = $region9
    $region8: #{tpu_custom_call.1} parent=1 // pred_region
      %26 = vsyncadd [#allocation6], 0
      %s27 = sshll.u32 %s1, 4
      %s28 = int_to_ptr.hbm [resolvable:$true] %s27
      %s29 = sshll.u32 [#allocation5], 4
      %s30 = int_to_ptr.vmem [resolvable:$true] %s29
      %35 = dma.hbm_to_vmem [thread:$0]  %s28, 512, %s30, [#allocation6], 128, 128, 8
    $region9: #{tpu_custom_call.1} parent=1 // pred_fallthru
      _
    // Predicated region
    $region10: #{tpu_custom_call.1} parent=1 // pred_check
      _
    $region11: #{tpu_custom_call.1} parent=1 // pred_check_branch
      %37 = sbr.rel (0) target = $region13
    $region12: #{tpu_custom_call.1} parent=1 // pred_region
      %39 = dma.done [#allocation3], 512
    $region13: #{tpu_custom_call.1} parent=1 // pred_fallthru
      _
    // Predicated region
    $region14: #{tpu_custom_call.1} parent=1 // pred_check
      _
    $region15: #{tpu_custom_call.1} parent=1 // pred_check_branch
      %41 = sbr.rel (0) target = $region17
    $region16: #{tpu_custom_call.1} parent=1 // pred_region
      %43 = dma.done [#allocation6], 512
    $region17: #{tpu_custom_call.1} parent=1 // pred_fallthru
      _
    %v44 = vld [vmem:[#allocation2] sm:$0xff]
    %v45 = vld [vmem:[#allocation2 + $0x8] sm:$0xff]
    %v46 = vld [vmem:[#allocation2 + $0x10] sm:$0xff]
    %v47 = vld [vmem:[#allocation2 + $0x18] sm:$0xff]
    %v48 = vld [vmem:[#allocation5] sm:$0xff]
    %v49 = vld [vmem:[#allocation5 + $0x8] sm:$0xff]
    %v50 = vld [vmem:[#allocation5 + $0x10] sm:$0xff]
    %v51 = vld [vmem:[#allocation5 + $0x18] sm:$0xff]
    %vm52 = vcmask 261120
    %v54 = vsel %vm52, %v44, 0
    %v57 = vsel %vm52, %v45, 0
    %v60 = vsel %vm52, %v46, 0
    %v63 = vsel %vm52, %v47, 0
    %65 = vmatpush.msra.mxu0 0.0
    %66 = vmatpush.msra.mxu0 0.0
    %67 = vmatpush.msra.mxu0 0.0
    %68 = vmatpush.msra.mxu0 0.0
    %69 = vmatpush.msra.mxu0 0.0
    %70 = vmatpush.msra.mxu0 0.0
    %71 = vmatpush.msra.mxu0 0.0
    %72 = vmatpush.msra.mxu0 0.0
    %73 = vmatpush.msra.mxu0 0.0
    %74 = vmatpush.msra.mxu0 0.0
    %75 = vmatpush.msra.mxu0 0.0
    %76 = vmatpush.msra.mxu0 0.0
    %77 = vmatpush.msra.mxu0 %v51
    %78 = vmatpush.msra.mxu0 %v50
    %79 = vmatpush.msra.mxu0 %v49
    %80 = vmatpush.msra.mxu0 %v48
    %81 = vmatmul.f32.gmra.mxu0 %v54
    %v82 = vpop.f32.mrf.mxu0
    %v83 = vadd.f32 0.0, %v82
    %84 = vmatmul.f32.gmra.mxu0 %v57
    %v85 = vpop.f32.mrf.mxu0
    %v86 = vadd.f32 0.0, %v85
    %87 = vmatmul.f32.gmra.mxu0 %v60
    %v88 = vpop.f32.mrf.mxu0
    %v89 = vadd.f32 0.0, %v88
    %90 = vmatmul.f32.gmra.mxu0 %v63
    %v91 = vpop.f32.mrf.mxu0
    %v92 = vadd.f32 0.0, %v91
    %93 = vdwg.mxu0
    %94 = vst [vmem:[#allocation7] sm:$0xff] %v83
    %95 = vst [vmem:[#allocation7 + $0x8] sm:$0xff] %v86
    %96 = vst [vmem:[#allocation7 + $0x10] sm:$0xff] %v89
    %97 = vst [vmem:[#allocation7 + $0x18] sm:$0xff] %v92
    // Predicated region
    $region18: #{tpu_custom_call.1} parent=1 // pred_check
      _
    $region19: #{tpu_custom_call.1} parent=1 // pred_check_branch
      %99 = sbr.rel (0) target = $region21
    $region20: #{tpu_custom_call.1} parent=1 // pred_region
      %101 = vsyncadd [#allocation4], 0
      %s102 = sshll.u32 [#allocation7], 4
      %s103 = int_to_ptr.vmem [resolvable:$true] %s102
      %s104 = sshll.u32 %s2, 4
      %s105 = int_to_ptr.hbm [resolvable:$true] %s104
      %110 = dma.vmem_to_hbm [thread:$0]  %s103, 512, %s105, [#allocation4], 128, 128, 8
    $region21: #{tpu_custom_call.1} parent=1 // pred_fallthru
      _
    // Predicated region
    $region22: #{tpu_custom_call.1} parent=1 // pred_check
      _
    $region23: #{tpu_custom_call.1} parent=1 // pred_check_branch
      %112 = sbr.rel (0) target = $region25
    $region24: #{tpu_custom_call.1} parent=1 // pred_region
      %114 = dma.done [#allocation4], 512
    $region25: #{tpu_custom_call.1} parent=1 // pred_fallthru
      _
    %115 = vsyncpa [#allocation3], 1
    %116 = vsyncpa [#allocation6], 1
    %117 = vsyncpa [#allocation4], 1

</llo_original>
